<compile_context>
chip_gen: v5e
topology: v5e:2x2
jax: 0.10.0
libtpu: 0.0.40
codegen_flags: <defaults>
</compile_context>

<pallas_src>
import functools

import jax
import jax.numpy as jnp
from jax.experimental import pallas as pl
from jax.experimental.pallas import tpu as pltpu


# -----------------------------------------------------------------------------
# Kernel: one batch tile, full VAE forward pass fused.
# -----------------------------------------------------------------------------
def vae_kernel(
    xe_ref,            # (TB, input_dim + hidden_dim)   = x | eps
    w1_ref, b1_ref,    # (input_dim, 128), (1, 128)
    w2_ref, b2_ref,    # (128, 2*hidden_dim), (1, 2*hidden_dim)  = fc21 | fc22 fused
    w3_ref, b3_ref,    # (hidden_dim, 128), (1, 128)
    w4_ref, b4_ref,    # (128, out_dim), (1, out_dim)
    out_ref,           # (TB, out_dim + 2*hidden_dim)   = recon | mu | logvar
    *,
    input_dim, hidden_dim, out_dim, compute_dtype,
):
    xe = xe_ref[...]
    x = xe[:, :input_dim]
    eps = xe[:, input_dim:]

    # ---- encode ----
    h1 = jnp.dot(x.astype(compute_dtype), w1_ref[...].astype(compute_dtype),
                 preferred_element_type=jnp.float32) + b1_ref[...]
    h1 = jnp.maximum(h1, 0.0)                                   # F.relu (f32)

    # fused fc21 | fc22: one N = 2*hidden matmul instead of two N = hidden
    ml = jnp.dot(h1.astype(compute_dtype), w2_ref[...].astype(compute_dtype),
                 preferred_element_type=jnp.float32) + b2_ref[...]
    mu = ml[:, :hidden_dim]
    logvar = ml[:, hidden_dim:]

    # ---- reparameterize (f32 elementwise) ----
    std = jnp.exp(0.5 * logvar)
    z = mu + eps * std

    # ---- decode ----
    h3 = jnp.dot(z.astype(compute_dtype), w3_ref[...].astype(compute_dtype),
                 preferred_element_type=jnp.float32) + b3_ref[...]
    h3 = jnp.maximum(h3, 0.0)                                   # F.relu (f32)
    logits = jnp.dot(h3.astype(compute_dtype), w4_ref[...].astype(compute_dtype),
                     preferred_element_type=jnp.float32) + b4_ref[...]
    recon = jax.nn.sigmoid(logits)                              # torch.sigmoid (f32)

    # Single lane-dense packed output slab -> unmasked stores, one write stream.
    out_ref[...] = jnp.concatenate([recon, mu, logvar], axis=-1).astype(out_ref.dtype)


# -----------------------------------------------------------------------------
# Wrapper
# -----------------------------------------------------------------------------
@functools.partial(jax.jit, static_argnames=("tile_b", "compute_dtype"))
def vae_forward(x, eps, params, *, tile_b=512, compute_dtype=jnp.float32):
    """x: (B, input_dim), eps: (B, hidden_dim), params: dict of PyTorch-style weights."""
    B, input_dim = x.shape
    hidden_dim = params["w21"].shape[0]
    out_dim = params["w4"].shape[0]
    packed_dim = out_dim + 2 * hidden_dim

    # PyTorch nn.Linear stores weight as (out, in); transpose for x @ W.
    w1 = params["w1"].T                                               # (input_dim, 128)
    w2 = jnp.concatenate([params["w21"].T, params["w22"].T], axis=1)  # (128, 2*hidden)
    w3 = params["w3"].T                                               # (hidden, 128)
    w4 = params["w4"].T                                               # (128, out_dim)
    b1 = params["b1"].reshape(1, -1)
    b2 = jnp.concatenate([params["b21"], params["b22"]]).reshape(1, -1)
    b3 = params["b3"].reshape(1, -1)
    b4 = params["b4"].reshape(1, -1)

    # One input slab: x | eps -> one batch-tiled input DMA stream.
    xe = jnp.concatenate([x, eps], axis=1)            # (B, input_dim + hidden_dim)

    # Batch tile: big, clamped to B, multiple of 8 (f32 sublane).
    tb = min(int(tile_b), B)
    tb = max(8, (tb // 8) * 8)
    grid = (pl.cdiv(B, tb),)

    def batch_spec(n_feat):
        return pl.BlockSpec((tb, n_feat), lambda i: (i, 0))

    def full_spec(shape):
        return pl.BlockSpec(shape, lambda i: (0, 0))

    kernel = functools.partial(
        vae_kernel,
        input_dim=input_dim,
        hidden_dim=hidden_dim,
        out_dim=out_dim,
        compute_dtype=compute_dtype,
    )

    packed = pl.pallas_call(
        kernel,
        out_shape=jax.ShapeDtypeStruct((B, packed_dim), jnp.float32),
        grid_spec=pltpu.PrefetchScalarGridSpec(
            num_scalar_prefetch=0,
            grid=grid,
            in_specs=[
                batch_spec(input_dim + hidden_dim),   # x | eps
                full_spec(w1.shape), full_spec(b1.shape),
                full_spec(w2.shape), full_spec(b2.shape),
                full_spec(w3.shape), full_spec(b3.shape),
                full_spec(w4.shape), full_spec(b4.shape),
            ],
            out_specs=batch_spec(packed_dim),
        ),
        compiler_params=pltpu.CompilerParams(
            dimension_semantics=("parallel",),
        ),
    )(xe, w1, b1, w2, b2, w3, b3, w4, b4)

    recon = packed[:, :out_dim]
    mu = packed[:, out_dim:out_dim + hidden_dim]
    logvar = packed[:, out_dim + hidden_dim:]
    return recon, mu, logvar


# -----------------------------------------------------------------------------
# Deterministic parameter init (PyTorch-Linear-style uniform(-1/sqrt(fan_in), ..))
# -----------------------------------------------------------------------------
def init_params(key, input_dim, hidden_dim, out_dim):
    def linear(key, out_f, in_f):
        kw, kb = jax.random.split(key)
        bound = 1.0 / jnp.sqrt(in_f)
        w = jax.random.uniform(kw, (out_f, in_f), jnp.float32, -bound, bound)
        b = jax.random.uniform(kb, (out_f,), jnp.float32, -bound, bound)
        return w, b

    keys = jax.random.split(key, 5)
    w1, b1 = linear(keys[0], 128, input_dim)
    w21, b21 = linear(keys[1], hidden_dim, 128)
    w22, b22 = linear(keys[2], hidden_dim, 128)
    w3, b3 = linear(keys[3], 128, hidden_dim)
    w4, b4 = linear(keys[4], out_dim, 128)
    return dict(w1=w1, b1=b1, w21=w21, b21=b21, w22=w22, b22=b22,
                w3=w3, b3=b3, w4=w4, b4=b4)


# -----------------------------------------------------------------------------
# Pure-JAX reference (mirrors the PyTorch forward exactly)
# -----------------------------------------------------------------------------
def vae_forward_ref(x, eps, p):
    h1 = jax.nn.relu(x @ p["w1"].T + p["b1"])
    mu = h1 @ p["w21"].T + p["b21"]
    logvar = h1 @ p["w22"].T + p["b22"]
    std = jnp.exp(0.5 * logvar)
    z = mu + eps * std
    h3 = jax.nn.relu(z @ p["w3"].T + p["b3"])
    recon = jax.nn.sigmoid(h3 @ p["w4"].T + p["b4"])
    return recon, mu, logvar


if __name__ == "__main__":
    input_dim, hidden_dim, out_dim = 64, 32, 64
    batch = 64

    key = jax.random.PRNGKey(0)
    k_params, k_x, k_eps = jax.random.split(key, 3)

    params = init_params(k_params, input_dim, hidden_dim, out_dim)
    x = jax.random.normal(k_x, (batch, input_dim), jnp.float32)
    # torch.randn_like(std) -> deterministic standard-normal noise here
    eps = jax.random.normal(k_eps, (batch, hidden_dim), jnp.float32)
    # TODO(synk): eps could also be drawn in-kernel via pltpu.prng_seed/stateful_normal
    # to drop the noise HBM stream; kept host-side to match torch.randn_like exactly.

    # tile_b=32 -> multi-step grid even at this small test batch (exercises the
    # batch tiling; real workloads should use the 512-row default).
    recon, mu, logvar = vae_forward(x, eps, params, tile_b=32)
    jax.block_until_ready((recon, mu, logvar))

    recon_r, mu_r, logvar_r = vae_forward_ref(x, eps, params)
    assert recon.shape == (batch, out_dim)
    assert mu.shape == (batch, hidden_dim)
    assert logvar.shape == (batch, hidden_dim)
    assert jnp.allclose(recon, recon_r, atol=1e-5, rtol=1e-5)
    assert jnp.allclose(mu, mu_r, atol=1e-5, rtol=1e-5)
    assert jnp.allclose(logvar, logvar_r, atol=1e-5, rtol=1e-5)

    print("KERNEL_OK")
</pallas_src>

<mosaic_0001>
module attributes {stable_mosaic.version = 11 : i64} {
  func.func @vae_kernel(%arg0: i32, %arg1: memref<32x96xf32, #tpu.memory_space<vmem>>, %arg2: memref<64x128xf32, #tpu.memory_space<vmem>>, %arg3: memref<1x128xf32, #tpu.memory_space<vmem>>, %arg4: memref<128x64xf32, #tpu.memory_space<vmem>>, %arg5: memref<1x64xf32, #tpu.memory_space<vmem>>, %arg6: memref<32x128xf32, #tpu.memory_space<vmem>>, %arg7: memref<1x128xf32, #tpu.memory_space<vmem>>, %arg8: memref<128x64xf32, #tpu.memory_space<vmem>>, %arg9: memref<1x64xf32, #tpu.memory_space<vmem>>, %arg10: memref<32x128xf32, #tpu.memory_space<vmem>>) attributes {dimension_semantics = [#tpu.dimension_semantics<parallel>], iteration_bounds = array<i64: 2>, scalar_prefetch = 0 : i64, scratch_operands = 0 : i64, tpu.core_type = #tpu.core_type<tc>, window_params = [{transform_indices = @transform_0, window_bounds = array<i64: 32, 96>}, {pipeline_mode = #tpu.pipeline_mode<synchronous>, transform_indices = @transform_1, window_bounds = array<i64: 64, 128>}, {pipeline_mode = #tpu.pipeline_mode<synchronous>, transform_indices = @transform_2, window_bounds = array<i64: 1, 128>}, {pipeline_mode = #tpu.pipeline_mode<synchronous>, transform_indices = @transform_3, window_bounds = array<i64: 128, 64>}, {pipeline_mode = #tpu.pipeline_mode<synchronous>, transform_indices = @transform_4, window_bounds = array<i64: 1, 64>}, {pipeline_mode = #tpu.pipeline_mode<synchronous>, transform_indices = @transform_5, window_bounds = array<i64: 32, 128>}, {pipeline_mode = #tpu.pipeline_mode<synchronous>, transform_indices = @transform_6, window_bounds = array<i64: 1, 128>}, {pipeline_mode = #tpu.pipeline_mode<synchronous>, transform_indices = @transform_7, window_bounds = array<i64: 128, 64>}, {pipeline_mode = #tpu.pipeline_mode<synchronous>, transform_indices = @transform_8, window_bounds = array<i64: 1, 64>}, {transform_indices = @transform_9, window_bounds = array<i64: 32, 128>}]} {
    %c0 = arith.constant 0 : index
    %c0_0 = arith.constant 0 : index
    %0 = vector.load %arg1[%c0, %c0_0] : memref<32x96xf32, #tpu.memory_space<vmem>>, vector<32x96xf32>
    %1 = vector.extract_strided_slice %0 {offsets = [0, 0], sizes = [32, 64], strides = [1, 1]} : vector<32x96xf32> to vector<32x64xf32>
    %2 = vector.extract_strided_slice %0 {offsets = [0, 64], sizes = [32, 32], strides = [1, 1]} : vector<32x96xf32> to vector<32x32xf32>
    %c0_1 = arith.constant 0 : index
    %c0_2 = arith.constant 0 : index
    %3 = vector.load %arg2[%c0_1, %c0_2] : memref<64x128xf32, #tpu.memory_space<vmem>>, vector<64x128xf32>
    %cst = arith.constant dense<0.000000e+00> : vector<32x128xf32>
    %4 = tpu.matmul %1, %3, %cst {dimension_numbers = #tpu.dot_dimension_numbers<[1], [0], [0], [1], [0, 0, 1, 1], [], []>} : vector<32x64xf32>, vector<64x128xf32>, vector<32x128xf32> -> vector<32x128xf32>
    %c0_3 = arith.constant 0 : index
    %c0_4 = arith.constant 0 : index
    %5 = vector.load %arg3[%c0_3, %c0_4] : memref<1x128xf32, #tpu.memory_space<vmem>>, vector<1x128xf32>
    %6 = vector.broadcast %5 : vector<1x128xf32> to vector<32x128xf32>
    %7 = arith.addf %4, %6 : vector<32x128xf32>
    %cst_5 = arith.constant 0.000000e+00 : f32
    %8 = vector.broadcast %cst_5 : f32 to vector<32x128xf32>
    %9 = arith.maximumf %7, %8 : vector<32x128xf32>
    %c0_6 = arith.constant 0 : index
    %c0_7 = arith.constant 0 : index
    %10 = vector.load %arg4[%c0_6, %c0_7] : memref<128x64xf32, #tpu.memory_space<vmem>>, vector<128x64xf32>
    %cst_8 = arith.constant dense<0.000000e+00> : vector<32x64xf32>
    %11 = tpu.matmul %9, %10, %cst_8 {dimension_numbers = #tpu.dot_dimension_numbers<[1], [0], [0], [1], [0, 0, 1, 1], [], []>} : vector<32x128xf32>, vector<128x64xf32>, vector<32x64xf32> -> vector<32x64xf32>
    %c0_9 = arith.constant 0 : index
    %c0_10 = arith.constant 0 : index
    %12 = vector.load %arg5[%c0_9, %c0_10] : memref<1x64xf32, #tpu.memory_space<vmem>>, vector<1x64xf32>
    %13 = vector.broadcast %12 : vector<1x64xf32> to vector<32x64xf32>
    %14 = arith.addf %11, %13 : vector<32x64xf32>
    %15 = vector.extract_strided_slice %14 {offsets = [0, 0], sizes = [32, 32], strides = [1, 1]} : vector<32x64xf32> to vector<32x32xf32>
    %16 = vector.extract_strided_slice %14 {offsets = [0, 32], sizes = [32, 32], strides = [1, 1]} : vector<32x64xf32> to vector<32x32xf32>
    %cst_11 = arith.constant 5.000000e-01 : f32
    %17 = vector.broadcast %cst_11 : f32 to vector<32x32xf32>
    %18 = arith.mulf %17, %16 : vector<32x32xf32>
    %19 = math.exp %18 : vector<32x32xf32>
    %20 = arith.mulf %2, %19 : vector<32x32xf32>
    %21 = arith.addf %15, %20 : vector<32x32xf32>
    %c0_12 = arith.constant 0 : index
    %c0_13 = arith.constant 0 : index
    %22 = vector.load %arg6[%c0_12, %c0_13] : memref<32x128xf32, #tpu.memory_space<vmem>>, vector<32x128xf32>
    %cst_14 = arith.constant dense<0.000000e+00> : vector<32x128xf32>
    %23 = tpu.matmul %21, %22, %cst_14 {dimension_numbers = #tpu.dot_dimension_numbers<[1], [0], [0], [1], [0, 0, 1, 1], [], []>} : vector<32x32xf32>, vector<32x128xf32>, vector<32x128xf32> -> vector<32x128xf32>
    %c0_15 = arith.constant 0 : index
    %c0_16 = arith.constant 0 : index
    %24 = vector.load %arg7[%c0_15, %c0_16] : memref<1x128xf32, #tpu.memory_space<vmem>>, vector<1x128xf32>
    %25 = vector.broadcast %24 : vector<1x128xf32> to vector<32x128xf32>
    %26 = arith.addf %23, %25 : vector<32x128xf32>
    %cst_17 = arith.constant 0.000000e+00 : f32
    %27 = vector.broadcast %cst_17 : f32 to vector<32x128xf32>
    %28 = arith.maximumf %26, %27 : vector<32x128xf32>
    %c0_18 = arith.constant 0 : index
    %c0_19 = arith.constant 0 : index
    %29 = vector.load %arg8[%c0_18, %c0_19] : memref<128x64xf32, #tpu.memory_space<vmem>>, vector<128x64xf32>
    %cst_20 = arith.constant dense<0.000000e+00> : vector<32x64xf32>
    %30 = tpu.matmul %28, %29, %cst_20 {dimension_numbers = #tpu.dot_dimension_numbers<[1], [0], [0], [1], [0, 0, 1, 1], [], []>} : vector<32x128xf32>, vector<128x64xf32>, vector<32x64xf32> -> vector<32x64xf32>
    %c0_21 = arith.constant 0 : index
    %c0_22 = arith.constant 0 : index
    %31 = vector.load %arg9[%c0_21, %c0_22] : memref<1x64xf32, #tpu.memory_space<vmem>>, vector<1x64xf32>
    %32 = vector.broadcast %31 : vector<1x64xf32> to vector<32x64xf32>
    %33 = arith.addf %30, %32 : vector<32x64xf32>
    %34 = arith.negf %33 : vector<32x64xf32>
    %35 = math.exp %34 : vector<32x64xf32>
    %cst_23 = arith.constant 1.000000e+00 : f32
    %36 = vector.broadcast %cst_23 : f32 to vector<32x64xf32>
    %37 = arith.addf %36, %35 : vector<32x64xf32>
    %38 = arith.divf %36, %37 : vector<32x64xf32>
    %39 = tpu.concatenate %38, %15, %16 in 1 : vector<32x64xf32>, vector<32x32xf32>, vector<32x32xf32> -> vector<32x128xf32>
    %c0_24 = arith.constant 0 : index
    %c0_25 = arith.constant 0 : index
    %40 = vector.load %arg10[%c0_24, %c0_25] : memref<32x128xf32, #tpu.memory_space<vmem>>, vector<32x128xf32>
    tpu.vector_store %arg10[%c0_24, %c0_25], %39 {strides = array<i32>} : memref<32x128xf32, #tpu.memory_space<vmem>>, vector<32x128xf32>,
    return
  }
  func.func @transform_0(%arg0: i32) -> (i32, i32) {
    %c0_i32 = arith.constant 0 : i32
    %c0_i32_0 = arith.constant 0 : i32
    return %arg0, %c0_i32 : i32, i32
  }
  func.func @transform_1(%arg0: i32) -> (i32, i32) {
    %c0_i32 = arith.constant 0 : i32
    %c0_i32_0 = arith.constant 0 : i32
    %c0_i32_1 = arith.constant 0 : i32
    return %c0_i32, %c0_i32_0 : i32, i32
  }
  func.func @transform_2(%arg0: i32) -> (i32, i32) {
    %c0_i32 = arith.constant 0 : i32
    %c0_i32_0 = arith.constant 0 : i32
    %c0_i32_1 = arith.constant 0 : i32
    return %c0_i32, %c0_i32_0 : i32, i32
  }
  func.func @transform_3(%arg0: i32) -> (i32, i32) {
    %c0_i32 = arith.constant 0 : i32
    %c0_i32_0 = arith.constant 0 : i32
    %c0_i32_1 = arith.constant 0 : i32
    return %c0_i32, %c0_i32_0 : i32, i32
  }
  func.func @transform_4(%arg0: i32) -> (i32, i32) {
    %c0_i32 = arith.constant 0 : i32
    %c0_i32_0 = arith.constant 0 : i32
    %c0_i32_1 = arith.constant 0 : i32
    return %c0_i32, %c0_i32_0 : i32, i32
  }
  func.func @transform_5(%arg0: i32) -> (i32, i32) {
    %c0_i32 = arith.constant 0 : i32
    %c0_i32_0 = arith.constant 0 : i32
    %c0_i32_1 = arith.constant 0 : i32
    return %c0_i32, %c0_i32_0 : i32, i32
  }
  func.func @transform_6(%arg0: i32) -> (i32, i32) {
    %c0_i32 = arith.constant 0 : i32
    %c0_i32_0 = arith.constant 0 : i32
    %c0_i32_1 = arith.constant 0 : i32
    return %c0_i32, %c0_i32_0 : i32, i32
  }
  func.func @transform_7(%arg0: i32) -> (i32, i32) {
    %c0_i32 = arith.constant 0 : i32
    %c0_i32_0 = arith.constant 0 : i32
    %c0_i32_1 = arith.constant 0 : i32
    return %c0_i32, %c0_i32_0 : i32, i32
  }
  func.func @transform_8(%arg0: i32) -> (i32, i32) {
    %c0_i32 = arith.constant 0 : i32
    %c0_i32_0 = arith.constant 0 : i32
    %c0_i32_1 = arith.constant 0 : i32
    return %c0_i32, %c0_i32_0 : i32, i32
  }
  func.func @transform_9(%arg0: i32) -> (i32, i32) {
    %c0_i32 = arith.constant 0 : i32
    %c0_i32_0 = arith.constant 0 : i32
    return %arg0, %c0_i32 : i32, i32
  }
}

</mosaic_0001>

<llo_original>
// kernel: vae_forward.1
$region0: #{vae_forward.1}
  #allocation0 [shape = 'u32[]', space=smem, size = 0x4, offset = 0x4, fixed_abs, tag = 'smem constant byte address 0x4 - core index']
  #allocation1 [shape = 'u32[72,128]{1,0:T(1,128)}', space=vmem, size = 0x9000, scoped, tag = 'internal scratch']
  %s0 = inlined_call_operand.vmem [shape: f32[64,96], index: 0, kind: input, shape index: {}]
  %s1 = inlined_call_operand.vmem [shape: f32[64,128], index: 1, kind: input, shape index: {}]
  %s2 = inlined_call_operand.vmem [shape: f32[1,128], index: 2, kind: input, shape index: {}]
  %s3 = inlined_call_operand.vmem [shape: f32[128,64], index: 3, kind: input, shape index: {}]
  %s4 = inlined_call_operand.vmem [shape: f32[1,64], index: 4, kind: input, shape index: {}]
  %s5 = inlined_call_operand.vmem [shape: f32[32,128], index: 5, kind: input, shape index: {}]
  %s6 = inlined_call_operand.vmem [shape: f32[1,128], index: 6, kind: input, shape index: {}]
  %s7 = inlined_call_operand.vmem [shape: f32[128,64], index: 7, kind: input, shape index: {}]
  %s8 = inlined_call_operand.vmem [shape: f32[1,64], index: 8, kind: input, shape index: {}]
  %s9 = inlined_call_operand.vmem [shape: f32[64,128], index: 9, kind: output, shape index: {}]
  %s10 = sld [smem:[#allocation0]]
  $region69: #{vae_forward.1} parent=0
    _
  %s12 = ssub.s32 1, %s10
  %s13 = scalar_select 0, %s12, %s10
  loop: start=0, step=1, limit=4
  $region2: #{vae_forward.1} parent=0 // loop_pre_header
    _
  $region3: #{vae_forward.1} parent=0 // loop_header
    %s15 = sphi 0, %s19
    %p16 = scmp.ge.s32.totalorder %s15, 4
    %s25 = sphi 0, %s27
    %s28 = sphi 0, %s25
    %s29 = sphi 0, %s28
    %s45 = sphi 0, %s29
    %s49 = sphi 0, %s49
    %s51 = sphi 0, %s49
    %s52 = sphi 0, %s51
    %s66 = sphi 0, %s52
    %s70 = sphi 0, %s70
    %s72 = sphi 0, %s70
    %s73 = sphi 0, %s72
    %s87 = sphi 0, %s73
    %s91 = sphi 0, %s91
    %s93 = sphi 0, %s91
    %s94 = sphi 0, %s93
    %s108 = sphi 0, %s94
    %s112 = sphi 0, %s112
    %s114 = sphi 0, %s112
    %s115 = sphi 0, %s114
    %s129 = sphi 0, %s115
    %s133 = sphi 0, %s133
    %s135 = sphi 0, %s133
    %s136 = sphi 0, %s135
    %s150 = sphi 0, %s136
    %s154 = sphi 0, %s154
    %s156 = sphi 0, %s154
    %s157 = sphi 0, %s156
    %s171 = sphi 0, %s157
    %s175 = sphi 0, %s175
    %s177 = sphi 0, %s175
    %s178 = sphi 0, %s177
    %s192 = sphi 0, %s178
    %s196 = sphi 0, %s196
    %s198 = sphi 0, %s196
    %s199 = sphi 0, %s198
    %s213 = sphi 0, %s199
    %s219 = sphi 0, %s221
    %s222 = sphi 0, %s219
    %s223 = sphi 0, %s222
    %s239 = sphi 0, %s223
  $region4: #{vae_forward.1} parent=0 // loop_header_branch
    %18 = sbr.rel (%p16) target = $region8
  $region5: #{vae_forward.1} parent=0 // loop_body
    %s20 = ssub.s32 %s15, 1
    %s21 = ssub.s32 %s15, 2
    %s22 = sadd.s32 %s15, 1
    %s23 = ssub.s32 %s15, %s22
    %p24 = scmp.eq.s32.totalorder %s23, 0
    %s26 = sadd.s32 %s25, 1
    %s27 = scalar_select %p24, %s25, %s26
    %p30 = pneg %p24
    %p31 = scmp.eq.s32.totalorder %s15, 1
    %p32 = por %p30, %p31
    %p33 = scmp.ne.s32.totalorder %s25, %s28
    %p34 = scmp.eq.s32.totalorder %s15, 0
    %p35 = por %p33, %p34
    %p36 = scmp.ne.s32.totalorder %s25, %s28
    %p37 = scmp.eq.s32.totalorder %s20, 1
    %p38 = por %p36, %p37
    %p39 = scmp.ne.s32.totalorder %s28, %s29
    %p40 = scmp.eq.s32.totalorder %s20, 0
    %p41 = por %p39, %p40
    %p42 = scmp.ne.s32.totalorder %s28, %s29
    %p43 = scmp.eq.s32.totalorder %s21, 1
    %p44 = por %p42, %p43
    %p46 = scmp.ne.s32.totalorder %s29, %s45
    %p47 = scmp.eq.s32.totalorder %s21, 0
    %p48 = por %p46, %p47
    %s50 = sadd.s32 %s49, 1
    %p53 = scmp.eq.s32.totalorder %s15, 1
    %p54 = scmp.ne.s32.totalorder %s49, %s51
    %p55 = scmp.eq.s32.totalorder %s15, 0
    %p56 = por %p54, %p55
    %p57 = scmp.ne.s32.totalorder %s49, %s51
    %p58 = scmp.eq.s32.totalorder %s20, 1
    %p59 = por %p57, %p58
    %p60 = scmp.ne.s32.totalorder %s51, %s52
    %p61 = scmp.eq.s32.totalorder %s20, 0
    %p62 = por %p60, %p61
    %p63 = scmp.ne.s32.totalorder %s51, %s52
    %p64 = scmp.eq.s32.totalorder %s21, 1
    %p65 = por %p63, %p64
    %p67 = scmp.ne.s32.totalorder %s52, %s66
    %p68 = scmp.eq.s32.totalorder %s21, 0
    %p69 = por %p67, %p68
    %s71 = sadd.s32 %s70, 1
    %p74 = scmp.eq.s32.totalorder %s15, 1
    %p75 = scmp.ne.s32.totalorder %s70, %s72
    %p76 = scmp.eq.s32.totalorder %s15, 0
    %p77 = por %p75, %p76
    %p78 = scmp.ne.s32.totalorder %s70, %s72
    %p79 = scmp.eq.s32.totalorder %s20, 1
    %p80 = por %p78, %p79
    %p81 = scmp.ne.s32.totalorder %s72, %s73
    %p82 = scmp.eq.s32.totalorder %s20, 0
    %p83 = por %p81, %p82
    %p84 = scmp.ne.s32.totalorder %s72, %s73
    %p85 = scmp.eq.s32.totalorder %s21, 1
    %p86 = por %p84, %p85
    %p88 = scmp.ne.s32.totalorder %s73, %s87
    %p89 = scmp.eq.s32.totalorder %s21, 0
    %p90 = por %p88, %p89
    %s92 = sadd.s32 %s91, 1
    %p95 = scmp.eq.s32.totalorder %s15, 1
    %p96 = scmp.ne.s32.totalorder %s91, %s93
    %p97 = scmp.eq.s32.totalorder %s15, 0
    %p98 = por %p96, %p97
    %p99 = scmp.ne.s32.totalorder %s91, %s93
    %p100 = scmp.eq.s32.totalorder %s20, 1
    %p101 = por %p99, %p100
    %p102 = scmp.ne.s32.totalorder %s93, %s94
    %p103 = scmp.eq.s32.totalorder %s20, 0
    %p104 = por %p102, %p103
    %p105 = scmp.ne.s32.totalorder %s93, %s94
    %p106 = scmp.eq.s32.totalorder %s21, 1
    %p107 = por %p105, %p106
    %p109 = scmp.ne.s32.totalorder %s94, %s108
    %p110 = scmp.eq.s32.totalorder %s21, 0
    %p111 = por %p109, %p110
    %s113 = sadd.s32 %s112, 1
    %p116 = scmp.eq.s32.totalorder %s15, 1
    %p117 = scmp.ne.s32.totalorder %s112, %s114
    %p118 = scmp.eq.s32.totalorder %s15, 0
    %p119 = por %p117, %p118
    %p120 = scmp.ne.s32.totalorder %s112, %s114
    %p121 = scmp.eq.s32.totalorder %s20, 1
    %p122 = por %p120, %p121
    %p123 = scmp.ne.s32.totalorder %s114, %s115
    %p124 = scmp.eq.s32.totalorder %s20, 0
    %p125 = por %p123, %p124
    %p126 = scmp.ne.s32.totalorder %s114, %s115
    %p127 = scmp.eq.s32.totalorder %s21, 1
    %p128 = por %p126, %p127
    %p130 = scmp.ne.s32.totalorder %s115, %s129
    %p131 = scmp.eq.s32.totalorder %s21, 0
    %p132 = por %p130, %p131
    %s134 = sadd.s32 %s133, 1
    %p137 = scmp.eq.s32.totalorder %s15, 1
    %p138 = scmp.ne.s32.totalorder %s133, %s135
    %p139 = scmp.eq.s32.totalorder %s15, 0
    %p140 = por %p138, %p139
    %p141 = scmp.ne.s32.totalorder %s133, %s135
    %p142 = scmp.eq.s32.totalorder %s20, 1
    %p143 = por %p141, %p142
    %p144 = scmp.ne.s32.totalorder %s135, %s136
    %p145 = scmp.eq.s32.totalorder %s20, 0
    %p146 = por %p144, %p145
    %p147 = scmp.ne.s32.totalorder %s135, %s136
    %p148 = scmp.eq.s32.totalorder %s21, 1
    %p149 = por %p147, %p148
    %p151 = scmp.ne.s32.totalorder %s136, %s150
    %p152 = scmp.eq.s32.totalorder %s21, 0
    %p153 = por %p151, %p152
    %s155 = sadd.s32 %s154, 1
    %p158 = scmp.eq.s32.totalorder %s15, 1
    %p159 = scmp.ne.s32.totalorder %s154, %s156
    %p160 = scmp.eq.s32.totalorder %s15, 0
    %p161 = por %p159, %p160
    %p162 = scmp.ne.s32.totalorder %s154, %s156
    %p163 = scmp.eq.s32.totalorder %s20, 1
    %p164 = por %p162, %p163
    %p165 = scmp.ne.s32.totalorder %s156, %s157
    %p166 = scmp.eq.s32.totalorder %s20, 0
    %p167 = por %p165, %p166
    %p168 = scmp.ne.s32.totalorder %s156, %s157
    %p169 = scmp.eq.s32.totalorder %s21, 1
    %p170 = por %p168, %p169
    %p172 = scmp.ne.s32.totalorder %s157, %s171
    %p173 = scmp.eq.s32.totalorder %s21, 0
    %p174 = por %p172, %p173
    %s176 = sadd.s32 %s175, 1
    %p179 = scmp.eq.s32.totalorder %s15, 1
    %p180 = scmp.ne.s32.totalorder %s175, %s177
    %p181 = scmp.eq.s32.totalorder %s15, 0
    %p182 = por %p180, %p181
    %p183 = scmp.ne.s32.totalorder %s175, %s177
    %p184 = scmp.eq.s32.totalorder %s20, 1
    %p185 = por %p183, %p184
    %p186 = scmp.ne.s32.totalorder %s177, %s178
    %p187 = scmp.eq.s32.totalorder %s20, 0
    %p188 = por %p186, %p187
    %p189 = scmp.ne.s32.totalorder %s177, %s178
    %p190 = scmp.eq.s32.totalorder %s21, 1
    %p191 = por %p189, %p190
    %p193 = scmp.ne.s32.totalorder %s178, %s192
    %p194 = scmp.eq.s32.totalorder %s21, 0
    %p195 = por %p193, %p194
    %s197 = sadd.s32 %s196, 1
    %p200 = scmp.eq.s32.totalorder %s15, 1
    %p201 = scmp.ne.s32.totalorder %s196, %s198
    %p202 = scmp.eq.s32.totalorder %s15, 0
    %p203 = por %p201, %p202
    %p204 = scmp.ne.s32.totalorder %s196, %s198
    %p205 = scmp.eq.s32.totalorder %s20, 1
    %p206 = por %p204, %p205
    %p207 = scmp.ne.s32.totalorder %s198, %s199
    %p208 = scmp.eq.s32.totalorder %s20, 0
    %p209 = por %p207, %p208
    %p210 = scmp.ne.s32.totalorder %s198, %s199
    %p211 = scmp.eq.s32.totalorder %s21, 1
    %p212 = por %p210, %p211
    %p214 = scmp.ne.s32.totalorder %s199, %s213
    %p215 = scmp.eq.s32.totalorder %s21, 0
    %p216 = por %p214, %p215
    %s217 = ssub.s32 %s15, %s22
    %p218 = scmp.eq.s32.totalorder %s217, 0
    %s220 = sadd.s32 %s219, 1
    %s221 = scalar_select %p218, %s219, %s220
    %p224 = pneg %p218
    %p225 = scmp.eq.s32.totalorder %s15, 1
    %p226 = por %p224, %p225
    %p227 = scmp.ne.s32.totalorder %s219, %s222
    %p228 = scmp.eq.s32.totalorder %s15, 0
    %p229 = por %p227, %p228
    %p230 = scmp.ne.s32.totalorder %s219, %s222
    %p231 = scmp.eq.s32.totalorder %s20, 1
    %p232 = por %p230, %p231
    %p233 = scmp.ne.s32.totalorder %s222, %s223
    %p234 = scmp.eq.s32.totalorder %s20, 0
    %p235 = por %p233, %p234
    %p236 = scmp.ne.s32.totalorder %s222, %s223
    %p237 = scmp.eq.s32.totalorder %s21, 1
    %p238 = por %p236, %p237
    %p240 = scmp.ne.s32.totalorder %s223, %s239
    %p241 = scmp.eq.s32.totalorder %s21, 0
    %p242 = por %p240, %p241
    %p243 = scmp.le.s32.totalorder 1, %s15
    %p244 = scmp.lt.s32.totalorder %s15, 3
    %p245 = pnand %p243, %p244
    %p246 = pneg %p245
    // Predicated region
    $region9: #{vae_forward.1} parent=5 // pred_check
      _
    $region10: #{vae_forward.1} parent=5 // pred_check_branch
      %248 = sbr.rel (%p245) target = $region12
    $region11: #{vae_forward.1} parent=5 // pred_region
      %s249 = ssub.s32 %s15, 1
      // Predicated region
      $region13: #{vae_forward.1} parent=11 // pred_check
        %p250 = pneg %p62
      $region14: #{vae_forward.1} parent=11 // pred_check_branch
        %252 = sbr.rel (%p250) target = $region16
      $region15: #{vae_forward.1} parent=11 // pred_region
        _
      $region16: #{vae_forward.1} parent=11 // pred_fallthru
        _
      // Predicated region
      $region17: #{vae_forward.1} parent=11 // pred_check
        %p253 = pneg %p83
      $region18: #{vae_forward.1} parent=11 // pred_check_branch
        %255 = sbr.rel (%p253) target = $region20
      $region19: #{vae_forward.1} parent=11 // pred_region
        _
      $region20: #{vae_forward.1} parent=11 // pred_fallthru
        _
      // Predicated region
      $region21: #{vae_forward.1} parent=11 // pred_check
        %p256 = pneg %p104
      $region22: #{vae_forward.1} parent=11 // pred_check_branch
        %258 = sbr.rel (%p256) target = $region24
      $region23: #{vae_forward.1} parent=11 // pred_region
        _
      $region24: #{vae_forward.1} parent=11 // pred_fallthru
        _
      // Predicated region
      $region25: #{vae_forward.1} parent=11 // pred_check
        %p259 = pneg %p125
      $region26: #{vae_forward.1} parent=11 // pred_check_branch
        %261 = sbr.rel (%p259) target = $region28
      $region27: #{vae_forward.1} parent=11 // pred_region
        _
      $region28: #{vae_forward.1} parent=11 // pred_fallthru
        _
      // Predicated region
      $region29: #{vae_forward.1} parent=11 // pred_check
        %p262 = pneg %p146
      $region30: #{vae_forward.1} parent=11 // pred_check_branch
        %264 = sbr.rel (%p262) target = $region32
      $region31: #{vae_forward.1} parent=11 // pred_region
        _
      $region32: #{vae_forward.1} parent=11 // pred_fallthru
        _
      // Predicated region
      $region33: #{vae_forward.1} parent=11 // pred_check
        %p265 = pneg %p167
      $region34: #{vae_forward.1} parent=11 // pred_check_branch
        %267 = sbr.rel (%p265) target = $region36
      $region35: #{vae_forward.1} parent=11 // pred_region
        _
      $region36: #{vae_forward.1} parent=11 // pred_fallthru
        _
      // Predicated region
      $region37: #{vae_forward.1} parent=11 // pred_check
        %p268 = pneg %p188
      $region38: #{vae_forward.1} parent=11 // pred_check_branch
        %270 = sbr.rel (%p268) target = $region40
      $region39: #{vae_forward.1} parent=11 // pred_region
        _
      $region40: #{vae_forward.1} parent=11 // pred_fallthru
        _
      // Predicated region
      $region41: #{vae_forward.1} parent=11 // pred_check
        %p271 = pneg %p209
      $region42: #{vae_forward.1} parent=11 // pred_check_branch
        %273 = sbr.rel (%p271) target = $region44
      $region43: #{vae_forward.1} parent=11 // pred_region
        _
      $region44: #{vae_forward.1} parent=11 // pred_fallthru
        _
    $region12: #{vae_forward.1} parent=5 // pred_fallthru
      _
    %p274 = scmp.lt.s32.totalorder %s15, 2
    // Predicated region
    $region45: #{vae_forward.1} parent=5 // pred_check
      %p275 = pneg %p274
    $region46: #{vae_forward.1} parent=5 // pred_check_branch
      %277 = sbr.rel (%p275) target = $region48
    $region47: #{vae_forward.1} parent=5 // pred_region
      // Predicated region
      $region49: #{vae_forward.1} parent=47 // pred_check
        %p278 = pneg %p35
      $region50: #{vae_forward.1} parent=47 // pred_check_branch
        %280 = sbr.rel (%p278) target = $region52
      $region51: #{vae_forward.1} parent=47 // pred_region
        %s281 = smul.u32 4, %s15
        %p282 = scmp.lt.s32.totalorder %s281, 7
        %s283 = scalar_select %p282, %s281, 7
        %s284 = smul.addr %s283, 8
        %s285 = scalar_lea.vmem %s0, %s284
        %s286 = smul.u32 4, %s15
      $region52: #{vae_forward.1} parent=47 // pred_fallthru
        _
    $region48: #{vae_forward.1} parent=5 // pred_fallthru
      _
    %p287 = scmp.le.s32.totalorder 1, %s15
    %p288 = scmp.lt.s32.totalorder %s15, 3
    %p289 = pnand %p287, %p288
    %p290 = pneg %p289
    // Predicated region
    $region53: #{vae_forward.1} parent=5 // pred_check
      _
    $region54: #{vae_forward.1} parent=5 // pred_check_branch
      %292 = sbr.rel (%p289) target = $region56
    $region55: #{vae_forward.1} parent=5 // pred_region
      %s293 = ssub.s32 %s15, 1
      %s294 = smul.u32 4, %s20
      %p295 = scmp.lt.s32.totalorder %s294, 7
      %s296 = scalar_select %p295, %s294, 7
      %s297 = smul.addr %s296, 8
      %s298 = scalar_lea.vmem %s0, %s297
      %p299 = pneg %p41
      %p300 = pneg %p38
      %p301 = pneg %p62
      %p302 = pneg %p59
      %p303 = pneg %p83
      %p304 = pneg %p80
      %p305 = pneg %p104
      %p306 = pneg %p101
      %p307 = pneg %p125
      %p308 = pneg %p122
      %p309 = pneg %p146
      %p310 = pneg %p143
      %p311 = pneg %p167
      %p312 = pneg %p164
      %p313 = pneg %p188
      %p314 = pneg %p185
      %p315 = pneg %p209
      %p316 = pneg %p206
      %p317 = pneg %p235
      %p318 = pneg %p232
      %s319 = smul.u32 4, %s20
      %p320 = scmp.lt.s32.totalorder %s319, 7
      %s321 = scalar_select %p320, %s319, 7
      %s322 = smul.addr %s321, 8
      %s323 = scalar_lea.vmem %s9, %s322
      %s324 = smul.u32 4, %s20
      %p325 = scmp.lt.s32.totalorder %s324, 7
      %s326 = scalar_select %p325, %s324, 7
      %s327 = smul.addr %s326, 8
      %s328 = scalar_lea.vmem %s0, %s327
      %s329 = smul.u32 4, %s20
      %s330 = smul.u32 4, %s20
      %p331 = scmp.lt.s32.totalorder %s330, 7
      %s332 = scalar_select %p331, %s330, 7
      %s333 = smul.addr %s332, 8
      %s334 = scalar_lea.vmem %s9, %s333
      %s335 = smul.u32 4, %s20
      %v336 = vld [vmem:[%s328] sm:$0xff]
      %v337 = vld [vmem:[%s328 + $0x8] sm:$0xff]
      %v338 = vld [vmem:[%s328 + $0x10] sm:$0xff]
      %v339 = vld [vmem:[%s328 + $0x18] sm:$0xff]
      %v340 = vld [vmem:[%s1] sm:$0xff]
      %v341 = vld [vmem:[%s1 + $0x8] sm:$0xff]
      %v342 = vld [vmem:[%s1 + $0x10] sm:$0xff]
      %v343 = vld [vmem:[%s1 + $0x18] sm:$0xff]
      %v344 = vld [vmem:[%s1 + $0x20] sm:$0xff]
      %v345 = vld [vmem:[%s1 + $0x28] sm:$0xff]
      %v346 = vld [vmem:[%s1 + $0x30] sm:$0xff]
      %v347 = vld [vmem:[%s1 + $0x38] sm:$0xff]
      %v348 = vld [vmem:[%s2] sm:$0x1]
      %v350 = vperm.slane %v348, 0
      %vm352 = vcmask 523264
      %v354 = vsel %vm352, %v336, 0
      %v357 = vsel %vm352, %v337, 0
      %v360 = vsel %vm352, %v338, 0
      %v363 = vsel %vm352, %v339, 0
      %365 = vmatpush.msra.mxu0 0.0
      %366 = vmatpush.msra.mxu0 0.0
      %367 = vmatpush.msra.mxu0 0.0
      %368 = vmatpush.msra.mxu0 0.0
      %369 = vmatpush.msra.mxu0 0.0
      %370 = vmatpush.msra.mxu0 0.0
      %371 = vmatpush.msra.mxu0 0.0
      %372 = vmatpush.msra.mxu0 0.0
      %373 = vmatpush.msra.mxu0 %v347
      %374 = vmatpush.msra.mxu0 %v346
      %375 = vmatpush.msra.mxu0 %v345
      %376 = vmatpush.msra.mxu0 %v344
      %377 = vmatpush.msra.mxu0 %v343
      %378 = vmatpush.msra.mxu0 %v342
      %379 = vmatpush.msra.mxu0 %v341
      %380 = vmatpush.msra.mxu0 %v340
      %381 = vmatmul.f32.gmra.mxu0 %v354
      %v382 = vpop.f32.mrf.mxu0
      %v383 = vadd.f32 %v350, %v382
      %384 = vmatmul.f32.gmra.mxu0 %v357
      %v385 = vpop.f32.mrf.mxu0
      %v386 = vadd.f32 %v350, %v385
      %387 = vmatmul.f32.gmra.mxu0 %v360
      %v388 = vpop.f32.mrf.mxu0
      %v389 = vadd.f32 %v350, %v388
      %390 = vmatmul.f32.gmra.mxu0 %v363
      %v391 = vpop.f32.mrf.mxu0
      %v392 = vadd.f32 %v350, %v391
      %393 = vdwg.mxu0
      %v394 = vmax.f32 %v383, 0.0
      %v395 = vmax.f32 %v386, 0.0
      %v396 = vmax.f32 %v389, 0.0
      %v397 = vmax.f32 %v392, 0.0
      %v398 = vld [vmem:[%s3] sm:$0xff]
      %v399 = vld [vmem:[%s3 + $0x8] sm:$0xff]
      %v400 = vld [vmem:[%s3 + $0x10] sm:$0xff]
      %v401 = vld [vmem:[%s3 + $0x18] sm:$0xff]
      %v402 = vld [vmem:[%s3 + $0x20] sm:$0xff]
      %v403 = vld [vmem:[%s3 + $0x28] sm:$0xff]
      %v404 = vld [vmem:[%s3 + $0x30] sm:$0xff]
      %v405 = vld [vmem:[%s3 + $0x38] sm:$0xff]
      %v406 = vld [vmem:[%s3 + $0x40] sm:$0xff]
      %v407 = vld [vmem:[%s3 + $0x48] sm:$0xff]
      %v408 = vld [vmem:[%s3 + $0x50] sm:$0xff]
      %v409 = vld [vmem:[%s3 + $0x58] sm:$0xff]
      %v410 = vld [vmem:[%s3 + $0x60] sm:$0xff]
      %v411 = vld [vmem:[%s3 + $0x68] sm:$0xff]
      %v412 = vld [vmem:[%s3 + $0x70] sm:$0xff]
      %v413 = vld [vmem:[%s3 + $0x78] sm:$0xff]
      %v414 = vld [vmem:[%s4] sm:$0x1]
      %v416 = vperm.slane %v414, 0
      %418 = vmatpush.msra.mxu0 %v413
      %419 = vmatpush.msra.mxu0 %v412
      %420 = vmatpush.msra.mxu0 %v411
      %421 = vmatpush.msra.mxu0 %v410
      %422 = vmatpush.msra.mxu0 %v409
      %423 = vmatpush.msra.mxu0 %v408
      %424 = vmatpush.msra.mxu0 %v407
      %425 = vmatpush.msra.mxu0 %v406
      %426 = vmatpush.msra.mxu0 %v405
      %427 = vmatpush.msra.mxu0 %v404
      %428 = vmatpush.msra.mxu0 %v403
      %429 = vmatpush.msra.mxu0 %v402
      %430 = vmatpush.msra.mxu0 %v401
      %431 = vmatpush.msra.mxu0 %v400
      %432 = vmatpush.msra.mxu0 %v399
      %433 = vmatpush.msra.mxu0 %v398
      %434 = vmatmul.f32.gmra.mxu0 %v394
      %v435 = vpop.f32.mrf.mxu0
      %v436 = vadd.f32 %v416, %v435
      %437 = vmatmul.f32.gmra.mxu0 %v395
      %v438 = vpop.f32.mrf.mxu0
      %v439 = vadd.f32 %v416, %v438
      %440 = vmatmul.f32.gmra.mxu0 %v396
      %v441 = vpop.f32.mrf.mxu0
      %v442 = vadd.f32 %v416, %v441
      %443 = vmatmul.f32.gmra.mxu0 %v397
      %v444 = vpop.f32.mrf.mxu0
      %v445 = vadd.f32 %v416, %v444
      %446 = vdwg.mxu0
      %v447 = vmul.f32 %v436, 0.5
      %v448 = vmul.f32 %v439, 0.5
      %v449 = vmul.f32 %v442, 0.5
      %v450 = vmul.f32 %v445, 0.5
      %v451 = vmul.f32 %v447, 1.442695
      %v452 = vpow.pop %v451
      %v453 = vmul.f32 %v448, 1.442695
      %v454 = vpow.pop %v453
      %v455 = vmul.f32 %v449, 1.442695
      %v456 = vpow.pop %v455
      %v457 = vmul.f32 %v450, 1.442695
      %v458 = vpow.pop %v457
      %463 = vrot.lane.b32.xlu0 %v452, 32
      %v464 = vpop.permute.xlu0 %463
      %465 = vrot.lane.b32.xlu0 %v454, 32
      %v466 = vpop.permute.xlu0 %465
      %467 = vrot.lane.b32.xlu0 %v456, 32
      %v468 = vpop.permute.xlu0 %467
      %469 = vrot.lane.b32.xlu0 %v458, 32
      %v470 = vpop.permute.xlu0 %469
      %v475 = vmul.f32 %v336, %v464
      %v476 = vmul.f32 %v337, %v466
      %v477 = vmul.f32 %v338, %v468
      %v478 = vmul.f32 %v339, %v470
      %483 = vrot.lane.b32.xlu0 %v475, 64
      %v484 = vpop.permute.xlu0 %483
      %485 = vrot.lane.b32.xlu0 %v476, 64
      %v486 = vpop.permute.xlu0 %485
      %487 = vrot.lane.b32.xlu0 %v477, 64
      %v488 = vpop.permute.xlu0 %487
      %489 = vrot.lane.b32.xlu0 %v478, 64
      %v490 = vpop.permute.xlu0 %489
      %v495 = vadd.f32 %v436, %v484
      %v496 = vadd.f32 %v439, %v486
      %v497 = vadd.f32 %v442, %v488
      %v498 = vadd.f32 %v445, %v490
      %v499 = vld [vmem:[%s5] sm:$0xff]
      %v500 = vld [vmem:[%s5 + $0x8] sm:$0xff]
      %v501 = vld [vmem:[%s5 + $0x10] sm:$0xff]
      %v502 = vld [vmem:[%s5 + $0x18] sm:$0xff]
      %v503 = vld [vmem:[%s6] sm:$0x1]
      %v505 = vperm.slane %v503, 0
      %vm507 = vcmask 261120
      %v509 = vsel %vm507, %v495, 0
      %v512 = vsel %vm507, %v496, 0
      %v515 = vsel %vm507, %v497, 0
      %v518 = vsel %vm507, %v498, 0
      %520 = vmatpush.msra.mxu0 0.0
      %521 = vmatpush.msra.mxu0 0.0
      %522 = vmatpush.msra.mxu0 0.0
      %523 = vmatpush.msra.mxu0 0.0
      %524 = vmatpush.msra.mxu0 0.0
      %525 = vmatpush.msra.mxu0 0.0
      %526 = vmatpush.msra.mxu0 0.0
      %527 = vmatpush.msra.mxu0 0.0
      %528 = vmatpush.msra.mxu0 0.0
      %529 = vmatpush.msra.mxu0 0.0
      %530 = vmatpush.msra.mxu0 0.0
      %531 = vmatpush.msra.mxu0 0.0
      %532 = vmatpush.msra.mxu0 %v502
      %533 = vmatpush.msra.mxu0 %v501
      %534 = vmatpush.msra.mxu0 %v500
      %535 = vmatpush.msra.mxu0 %v499
      %536 = vmatmul.f32.gmra.mxu0 %v509
      %v537 = vpop.f32.mrf.mxu0
      %v538 = vadd.f32 %v505, %v537
      %539 = vmatmul.f32.gmra.mxu0 %v512
      %v540 = vpop.f32.mrf.mxu0
      %v541 = vadd.f32 %v505, %v540
      %542 = vmatmul.f32.gmra.mxu0 %v515
      %v543 = vpop.f32.mrf.mxu0
      %v544 = vadd.f32 %v505, %v543
      %545 = vmatmul.f32.gmra.mxu0 %v518
      %v546 = vpop.f32.mrf.mxu0
      %v547 = vadd.f32 %v505, %v546
      %548 = vdwg.mxu0
      %v549 = vmax.f32 %v538, 0.0
      %v550 = vmax.f32 %v541, 0.0
      %v551 = vmax.f32 %v544, 0.0
      %v552 = vmax.f32 %v547, 0.0
      %v553 = vld [vmem:[%s7] sm:$0xff]
      %v554 = vld [vmem:[%s7 + $0x8] sm:$0xff]
      %v555 = vld [vmem:[%s7 + $0x10] sm:$0xff]
      %v556 = vld [vmem:[%s7 + $0x18] sm:$0xff]
      %v557 = vld [vmem:[%s7 + $0x20] sm:$0xff]
      %v558 = vld [vmem:[%s7 + $0x28] sm:$0xff]
      %v559 = vld [vmem:[%s7 + $0x30] sm:$0xff]
      %v560 = vld [vmem:[%s7 + $0x38] sm:$0xff]
      %v561 = vld [vmem:[%s7 + $0x40] sm:$0xff]
      %v562 = vld [vmem:[%s7 + $0x48] sm:$0xff]
      %v563 = vld [vmem:[%s7 + $0x50] sm:$0xff]
      %v564 = vld [vmem:[%s7 + $0x58] sm:$0xff]
      %v565 = vld [vmem:[%s7 + $0x60] sm:$0xff]
      %v566 = vld [vmem:[%s7 + $0x68] sm:$0xff]
      %v567 = vld [vmem:[%s7 + $0x70] sm:$0xff]
      %v568 = vld [vmem:[%s7 + $0x78] sm:$0xff]
      %v569 = vld [vmem:[%s8] sm:$0x1]
      %v571 = vperm.slane %v569, 0
      %573 = vmatpush.msra.mxu0 %v568
      %574 = vmatpush.msra.mxu0 %v567
      %575 = vmatpush.msra.mxu0 %v566
      %576 = vmatpush.msra.mxu0 %v565
      %577 = vmatpush.msra.mxu0 %v564
      %578 = vmatpush.msra.mxu0 %v563
      %579 = vmatpush.msra.mxu0 %v562
      %580 = vmatpush.msra.mxu0 %v561
      %581 = vmatpush.msra.mxu0 %v560
      %582 = vmatpush.msra.mxu0 %v559
      %583 = vmatpush.msra.mxu0 %v558
      %584 = vmatpush.msra.mxu0 %v557
      %585 = vmatpush.msra.mxu0 %v556
      %586 = vmatpush.msra.mxu0 %v555
      %587 = vmatpush.msra.mxu0 %v554
      %588 = vmatpush.msra.mxu0 %v553
      %589 = vmatmul.f32.gmra.mxu0 %v549
      %v590 = vpop.f32.mrf.mxu0
      %v591 = vadd.f32 %v571, %v590
      %592 = vmatmul.f32.gmra.mxu0 %v550
      %v593 = vpop.f32.mrf.mxu0
      %v594 = vadd.f32 %v571, %v593
      %595 = vmatmul.f32.gmra.mxu0 %v551
      %v596 = vpop.f32.mrf.mxu0
      %v597 = vadd.f32 %v571, %v596
      %598 = vmatmul.f32.gmra.mxu0 %v552
      %v599 = vpop.f32.mrf.mxu0
      %v600 = vadd.f32 %v571, %v599
      %601 = vdwg.mxu0
      %v602 = vxor.u32 %v591, 2147483648
      %v603 = vxor.u32 %v594, 2147483648
      %v604 = vxor.u32 %v597, 2147483648
      %v605 = vxor.u32 %v600, 2147483648
      %v606 = vmul.f32 %v602, 1.442695
      %v607 = vpow.pop %v606
      %v608 = vmul.f32 %v603, 1.442695
      %v609 = vpow.pop %v608
      %v610 = vmul.f32 %v604, 1.442695
      %v611 = vpow.pop %v610
      %v612 = vmul.f32 %v605, 1.442695
      %v613 = vpow.pop %v612
      %v614 = vadd.f32 %v607, 1.0
      %v615 = vadd.f32 %v609, 1.0
      %v616 = vadd.f32 %v611, 1.0
      %v617 = vadd.f32 %v613, 1.0
      %v618 = vrcp.pop %v614
      %v619 = vmul.f32 %v614, %v618
      %v620 = vsub.f32 1.0, %v619
      %v621 = vmul.f32 %v618, %v620
      %v622 = vadd.f32 %v618, %v621
      %vm623 = vweird.f32 %v614
      %vm624 = vweird.f32 %v618
      %vm625 = vmor %vm623, %vm624
      %v626 = vsel %vm625, %v618, %v622
      %v627 = vand.u32 2147483647, %v614
      %vm628 = vcmp.eq.f32.partialorder %v627, 8.507059e+37
      %v629 = vand.u32 %v614, 2147483648
      %v630 = vor.u32 1.1754944e-38, %v629
      %v631 = vsel %vm628, %v630, %v626
      %v632 = vmul.f32 1.0, %v631
      %v633 = vrcp.pop %v615
      %v634 = vmul.f32 %v615, %v633
      %v635 = vsub.f32 1.0, %v634
      %v636 = vmul.f32 %v633, %v635
      %v637 = vadd.f32 %v633, %v636
      %vm638 = vweird.f32 %v615
      %vm639 = vweird.f32 %v633
      %vm640 = vmor %vm638, %vm639
      %v641 = vsel %vm640, %v633, %v637
      %v642 = vand.u32 2147483647, %v615
      %vm643 = vcmp.eq.f32.partialorder %v642, 8.507059e+37
      %v644 = vand.u32 %v615, 2147483648
      %v645 = vor.u32 1.1754944e-38, %v644
      %v646 = vsel %vm643, %v645, %v641
      %v647 = vmul.f32 1.0, %v646
      %v648 = vrcp.pop %v616
      %v649 = vmul.f32 %v616, %v648
      %v650 = vsub.f32 1.0, %v649
      %v651 = vmul.f32 %v648, %v650
      %v652 = vadd.f32 %v648, %v651
      %vm653 = vweird.f32 %v616
      %vm654 = vweird.f32 %v648
      %vm655 = vmor %vm653, %vm654
      %v656 = vsel %vm655, %v648, %v652
      %v657 = vand.u32 2147483647, %v616
      %vm658 = vcmp.eq.f32.partialorder %v657, 8.507059e+37
      %v659 = vand.u32 %v616, 2147483648
      %v660 = vor.u32 1.1754944e-38, %v659
      %v661 = vsel %vm658, %v660, %v656
      %v662 = vmul.f32 1.0, %v661
      %v663 = vrcp.pop %v617
      %v664 = vmul.f32 %v617, %v663
      %v665 = vsub.f32 1.0, %v664
      %v666 = vmul.f32 %v663, %v665
      %v667 = vadd.f32 %v663, %v666
      %vm668 = vweird.f32 %v617
      %vm669 = vweird.f32 %v663
      %vm670 = vmor %vm668, %vm669
      %v671 = vsel %vm670, %v663, %v667
      %v672 = vand.u32 2147483647, %v617
      %vm673 = vcmp.eq.f32.partialorder %v672, 8.507059e+37
      %v674 = vand.u32 %v617, 2147483648
      %v675 = vor.u32 1.1754944e-38, %v674
      %v676 = vsel %vm673, %v675, %v671
      %v677 = vmul.f32 1.0, %v676
      %682 = vrot.lane.b32.xlu0 %v436, 64
      %v683 = vpop.permute.xlu0 %682
      %684 = vrot.lane.b32.xlu0 %v439, 64
      %v685 = vpop.permute.xlu0 %684
      %686 = vrot.lane.b32.xlu0 %v442, 64
      %v687 = vpop.permute.xlu0 %686
      %688 = vrot.lane.b32.xlu0 %v445, 64
      %v689 = vpop.permute.xlu0 %688
      %v694 = vsel %vm352, %v632, %v683
      %v695 = vsel %vm352, %v647, %v685
      %v696 = vsel %vm352, %v662, %v687
      %v697 = vsel %vm352, %v677, %v689
      %vm698 = vcmask 785408
      %v699 = vsel %vm698, %v694, %v683
      %v700 = vsel %vm698, %v695, %v685
      %v701 = vsel %vm698, %v696, %v687
      %v702 = vsel %vm698, %v697, %v689
      %703 = vst [vmem:[%s334] sm:$0xff] %v699
      %704 = vst [vmem:[%s334 + $0x8] sm:$0xff] %v700
      %705 = vst [vmem:[%s334 + $0x10] sm:$0xff] %v701
      %706 = vst [vmem:[%s334 + $0x18] sm:$0xff] %v702
      %s707 = smul.u32 4, %s20
      %p708 = scmp.lt.s32.totalorder %s707, 7
      %s709 = scalar_select %p708, %s707, 7
      %s710 = smul.addr %s709, 8
      %s711 = scalar_lea.vmem %s9, %s710
      // Predicated region
      $region57: #{vae_forward.1} parent=55 // pred_check
        %p712 = pneg %p232
      $region58: #{vae_forward.1} parent=55 // pred_check_branch
        %714 = sbr.rel (%p712) target = $region60
      $region59: #{vae_forward.1} parent=55 // pred_region
        %s715 = smul.u32 4, %s20
      $region60: #{vae_forward.1} parent=55 // pred_fallthru
        _
    $region56: #{vae_forward.1} parent=5 // pred_fallthru
      _
    %p716 = scmp.le.s32.totalorder 2, %s15
    // Predicated region
    $region61: #{vae_forward.1} parent=5 // pred_check
      %p717 = pneg %p716
    $region62: #{vae_forward.1} parent=5 // pred_check_branch
      %719 = sbr.rel (%p717) target = $region64
    $region63: #{vae_forward.1} parent=5 // pred_region
      %s720 = ssub.s32 %s15, 2
      // Predicated region
      $region65: #{vae_forward.1} parent=63 // pred_check
        %p721 = pneg %p238
      $region66: #{vae_forward.1} parent=63 // pred_check_branch
        %723 = sbr.rel (%p721) target = $region68
      $region67: #{vae_forward.1} parent=63 // pred_region
        %s724 = smul.u32 4, %s21
        %p725 = scmp.lt.s32.totalorder %s724, 7
        %s726 = scalar_select %p725, %s724, 7
        %s727 = smul.addr %s726, 8
        %s728 = scalar_lea.vmem %s9, %s727
      $region68: #{vae_forward.1} parent=63 // pred_fallthru
        _
    $region64: #{vae_forward.1} parent=5 // pred_fallthru
      _
  $region6: #{vae_forward.1} parent=0 // loop_footer
    %s19 = sadd.s32 1, %s15
  $region7: #{vae_forward.1} parent=0 // loop_footer_branch
    %14 = sbr.rel target = $region3
  $region8: #{vae_forward.1} parent=0 // loop_exit
    _

</llo_original>
